<compile_context>
chip_gen: v6e
topology: v6e:2x2x1
jax: 0.10.0
libtpu: 0.0.40
codegen_flags: <defaults>
</compile_context>

<pallas_src>
import functools

import jax
import jax.numpy as jnp
from jax.experimental import pallas as pl
from jax.experimental.pallas import tpu as pltpu

LANE = 128  # TPU lane width; output-side feature dims are padded to a multiple of this.


def _pad_axis(a, axis, multiple):
    pad = (-a.shape[axis]) % multiple
    if pad == 0:
        return a
    cfg = [(0, 0)] * a.ndim
    cfg[axis] = (0, pad)
    return jnp.pad(a, cfg)


def _round_up(n, m):
    return ((n + m - 1) // m) * m


def _device_kind():
    try:
        return jax.devices()[0].device_kind.lower()
    except Exception:
        return ""


def pick_block_b(batch, device_kind=None):
    """Static batch-tile size: fewest grid steps on single-TC v5e/v6e, grid kept a
    multiple of 2 on dual-TC v7x so both TensorCores get work."""
    kind = _device_kind() if device_kind is None else device_kind
    dual_tc = ("v7" in kind) or ("7x" in kind)
    cap = 256  # fills MXU rows, keeps per-step fixed overhead low, VMEM stays tiny
    if dual_tc and batch > 8:
        tb = _round_up(pl.cdiv(batch, 2), 8)
    else:
        tb = _round_up(batch, 8)
    return max(8, min(cap, tb))


def use_bf16_epilogue(device_kind=None):
    """bf16 VPU lanes exist on v6e/v7x; keep the ReLU epilogue in f32 on v5e and older."""
    kind = _device_kind() if device_kind is None else device_kind
    return not any(s in kind for s in ("v2", "v3", "v4", "v5"))


def mlp_kernel(x_ref, w1_ref, b1_ref, w2_ref, b2_ref, w3_ref, b3_ref, o_ref, *,
               bf16_epilogue):
    # x_ref: (TB, Din) f32; w*_ref: (in, out) bf16; b*_ref: (1, out) f32; o_ref: (TB, NCp) f32.
    # bf16 MXU matmuls with f32 accumulation; the in-kernel x cast and the bias/ReLU
    # epilogue are VPU work fully hidden under the matmuls.
    x = x_ref[...].astype(jnp.bfloat16)

    def act(h_f32):
        if bf16_epilogue:
            return jnp.maximum(h_f32.astype(jnp.bfloat16), 0.0)
        return jnp.maximum(h_f32, 0.0).astype(jnp.bfloat16)

    h1 = act(jnp.dot(x, w1_ref[...], preferred_element_type=jnp.float32) + b1_ref[...])
    h2 = act(jnp.dot(h1, w2_ref[...], preferred_element_type=jnp.float32) + b2_ref[...])
    out = jnp.dot(h2, w3_ref[...], preferred_element_type=jnp.float32) + b3_ref[...]
    o_ref[...] = out.astype(o_ref.dtype)


def prepare_params(params):
    """One-time (init-time) prep: pad output-side feature dims to lane-dense multiples
    of 128, cast weights to bf16 and biases to f32 (1, out).  W1's in-dim is left at
    input_size so it matches the un-padded x."""
    w1, b1 = params["l1"]
    w2, b2 = params["l2"]
    w3, b3 = params["l3"]
    w1p = _pad_axis(w1, 1, LANE).astype(jnp.bfloat16)
    w2p = _pad_axis(_pad_axis(w2, 0, LANE), 1, LANE).astype(jnp.bfloat16)
    w3p = _pad_axis(_pad_axis(w3, 0, LANE), 1, LANE).astype(jnp.bfloat16)
    b1p = _pad_axis(b1.reshape(1, -1), 1, LANE).astype(jnp.float32)
    b2p = _pad_axis(b2.reshape(1, -1), 1, LANE).astype(jnp.float32)
    b3p = _pad_axis(b3.reshape(1, -1), 1, LANE).astype(jnp.float32)
    return {"w1": w1p, "b1": b1p, "w2": w2p, "b2": b2p, "w3": w3p, "b3": b3p}


@functools.partial(jax.jit, static_argnames=("block_b", "num_classes", "bf16_epilogue"))
def neural_net_forward(x, pp, *, block_b, num_classes, bf16_epilogue=True):
    """x: (B, input_size) float32.  pp: output of prepare_params (pre-padded, pre-cast)."""
    w1, b1 = pp["w1"], pp["b1"]
    w2, b2 = pp["w2"], pp["b2"]
    w3, b3 = pp["w3"], pp["b3"]

    B, Din = x.shape
    Hp = w1.shape[1]
    NCp = w3.shape[1]
    TB = block_b
    grid = (pl.cdiv(B, TB),)  # no batch pad: Pallas masks the partial tail block

    def _const(shape):
        # Constant index_map -> block stays VMEM-resident across grid steps.
        # TODO(synk): switch to pipeline_mode=pl.Buffered(1) / K-tiled specs if the
        # weights ever grow toward the v7x 64 MiB VMEM ceiling.
        return pl.BlockSpec(shape, lambda i: (0, 0))

    in_specs = [
        pl.BlockSpec((TB, Din), lambda i: (i, 0)),  # x tile (f32, cast in-kernel)
        _const((Din, Hp)), _const((1, Hp)),         # layer 1
        _const((Hp, Hp)), _const((1, Hp)),          # layer 2
        _const((Hp, NCp)), _const((1, NCp)),        # layer 3
    ]
    out_specs = pl.BlockSpec((TB, NCp), lambda i: (i, 0))

    flops = 2 * B * (Din * Hp + Hp * Hp + Hp * NCp)
    bytes_accessed = (
        4 * B * Din                                  # x (f32)
        + 2 * (Din * Hp + Hp * Hp + Hp * NCp)        # weights (bf16, fetched once)
        + 4 * (Hp + Hp + NCp)                        # biases (f32)
        + 4 * B * NCp                                # output (f32)
    )

    out_padded = pl.pallas_call(
        functools.partial(mlp_kernel, bf16_epilogue=bf16_epilogue),
        out_shape=jax.ShapeDtypeStruct((B, NCp), jnp.float32),
        grid=grid,
        in_specs=in_specs,
        out_specs=out_specs,
        compiler_params=pltpu.CompilerParams(
            dimension_semantics=("parallel",),   # batch tiles shard across TCs on v7x
            vmem_limit_bytes=32 * 1024 * 1024,
        ),
        cost_estimate=pl.CostEstimate(
            flops=flops, bytes_accessed=bytes_accessed, transcendentals=0
        ),
    )(x, w1, b1, w2, b2, w3, b3)

    # Slice off the class padding (batch was never padded).
    return out_padded[:, :num_classes]


def init_linear(key, in_features, out_features):
    """Deterministic init mimicking PyTorch nn.Linear default (uniform +/- 1/sqrt(in))."""
    kw, kb = jax.random.split(key)
    bound = 1.0 / (in_features ** 0.5)
    # Stored as (in_features, out_features), i.e. PyTorch weight transposed.
    w = jax.random.uniform(kw, (in_features, out_features), jnp.float32, -bound, bound)
    b = jax.random.uniform(kb, (out_features,), jnp.float32, -bound, bound)
    return w, b


def reference_forward(x, params):
    w1, b1 = params["l1"]
    w2, b2 = params["l2"]
    w3, b3 = params["l3"]
    h1 = jnp.maximum(x @ w1 + b1, 0.0)
    h2 = jnp.maximum(h1 @ w2 + b2, 0.0)
    return h2 @ w3 + b3


if __name__ == "__main__":
    # Non-multiple-of-128 feature dims and a batch that is not a multiple of the tile
    # exercise the padding + cdiv-grid (partial block) paths.
    batch, input_size, hidden_size, num_classes = 200, 64, 96, 10

    key = jax.random.PRNGKey(0)
    kx, k1, k2, k3 = jax.random.split(key, 4)

    x = jax.random.normal(kx, (batch, input_size), jnp.float32)
    params = {
        "l1": init_linear(k1, input_size, hidden_size),
        "l2": init_linear(k2, hidden_size, hidden_size),
        "l3": init_linear(k3, hidden_size, num_classes),
    }

    # One-time prep (hoisted out of the forward pass).
    pp = prepare_params(params)
    kind = _device_kind()
    tb = pick_block_b(batch, kind)
    bf16_epi = use_bf16_epilogue(kind)

    out = neural_net_forward(x, pp, block_b=tb, num_classes=num_classes,
                             bf16_epilogue=bf16_epi)
    out = jax.block_until_ready(out)

    ref = reference_forward(x, params)
    assert out.shape == (batch, num_classes)
    # bf16 matmul inputs with f32 accumulation -> loosened tolerance vs f32 reference.
    assert jnp.allclose(out, ref, atol=3e-2, rtol=3e-2), "mismatch vs reference"

    print("KERNEL_OK")
</pallas_src>

<mosaic_0001>
module attributes {stable_mosaic.version = 11 : i64} {
  func.func @mlp_kernel(%arg0: i32, %arg1: memref<200x64xf32, #tpu.memory_space<vmem>>, %arg2: memref<64x128xbf16, #tpu.memory_space<vmem>>, %arg3: memref<1x128xf32, #tpu.memory_space<vmem>>, %arg4: memref<128x128xbf16, #tpu.memory_space<vmem>>, %arg5: memref<1x128xf32, #tpu.memory_space<vmem>>, %arg6: memref<128x128xbf16, #tpu.memory_space<vmem>>, %arg7: memref<1x128xf32, #tpu.memory_space<vmem>>, %arg8: memref<200x128xf32, #tpu.memory_space<vmem>>) attributes {dimension_semantics = [#tpu.dimension_semantics<parallel>], iteration_bounds = array<i64: 1>, scalar_prefetch = 0 : i64, scratch_operands = 0 : i64, tpu.core_type = #tpu.core_type<tc>, window_params = [{transform_indices = @transform_0, window_bounds = array<i64: 200, 64>}, {pipeline_mode = #tpu.pipeline_mode<synchronous>, transform_indices = @transform_1, window_bounds = array<i64: 64, 128>}, {pipeline_mode = #tpu.pipeline_mode<synchronous>, transform_indices = @transform_2, window_bounds = array<i64: 1, 128>}, {pipeline_mode = #tpu.pipeline_mode<synchronous>, transform_indices = @transform_3, window_bounds = array<i64: 128, 128>}, {pipeline_mode = #tpu.pipeline_mode<synchronous>, transform_indices = @transform_4, window_bounds = array<i64: 1, 128>}, {pipeline_mode = #tpu.pipeline_mode<synchronous>, transform_indices = @transform_5, window_bounds = array<i64: 128, 128>}, {pipeline_mode = #tpu.pipeline_mode<synchronous>, transform_indices = @transform_6, window_bounds = array<i64: 1, 128>}, {transform_indices = @transform_7, window_bounds = array<i64: 200, 128>}]} {
    %c0 = arith.constant 0 : index
    %c0_0 = arith.constant 0 : index
    %0 = vector.load %arg1[%c0, %c0_0] : memref<200x64xf32, #tpu.memory_space<vmem>>, vector<200x64xf32>
    %1 = arith.truncf %0 : vector<200x64xf32> to vector<200x64xbf16>
    %c0_1 = arith.constant 0 : index
    %c0_2 = arith.constant 0 : index
    %2 = vector.load %arg2[%c0_1, %c0_2] : memref<64x128xbf16, #tpu.memory_space<vmem>>, vector<64x128xbf16>
    %cst = arith.constant dense<0.000000e+00> : vector<200x128xf32>
    %3 = tpu.matmul %1, %2, %cst {dimension_numbers = #tpu.dot_dimension_numbers<[1], [0], [0], [1], [0, 0, 1, 1], [], []>} : vector<200x64xbf16>, vector<64x128xbf16>, vector<200x128xf32> -> vector<200x128xf32>
    %c0_3 = arith.constant 0 : index
    %c0_4 = arith.constant 0 : index
    %4 = vector.load %arg3[%c0_3, %c0_4] : memref<1x128xf32, #tpu.memory_space<vmem>>, vector<1x128xf32>
    %5 = vector.broadcast %4 : vector<1x128xf32> to vector<200x128xf32>
    %6 = arith.addf %3, %5 : vector<200x128xf32>
    %7 = arith.truncf %6 : vector<200x128xf32> to vector<200x128xbf16>
    %cst_5 = arith.constant 0.000000e+00 : bf16
    %8 = vector.broadcast %cst_5 : bf16 to vector<200x128xbf16>
    %9 = arith.maximumf %7, %8 : vector<200x128xbf16>
    %c0_6 = arith.constant 0 : index
    %c0_7 = arith.constant 0 : index
    %10 = vector.load %arg4[%c0_6, %c0_7] : memref<128x128xbf16, #tpu.memory_space<vmem>>, vector<128x128xbf16>
    %cst_8 = arith.constant dense<0.000000e+00> : vector<200x128xf32>
    %11 = tpu.matmul %9, %10, %cst_8 {dimension_numbers = #tpu.dot_dimension_numbers<[1], [0], [0], [1], [0, 0, 1, 1], [], []>} : vector<200x128xbf16>, vector<128x128xbf16>, vector<200x128xf32> -> vector<200x128xf32>
    %c0_9 = arith.constant 0 : index
    %c0_10 = arith.constant 0 : index
    %12 = vector.load %arg5[%c0_9, %c0_10] : memref<1x128xf32, #tpu.memory_space<vmem>>, vector<1x128xf32>
    %13 = vector.broadcast %12 : vector<1x128xf32> to vector<200x128xf32>
    %14 = arith.addf %11, %13 : vector<200x128xf32>
    %15 = arith.truncf %14 : vector<200x128xf32> to vector<200x128xbf16>
    %cst_11 = arith.constant 0.000000e+00 : bf16
    %16 = vector.broadcast %cst_11 : bf16 to vector<200x128xbf16>
    %17 = arith.maximumf %15, %16 : vector<200x128xbf16>
    %c0_12 = arith.constant 0 : index
    %c0_13 = arith.constant 0 : index
    %18 = vector.load %arg6[%c0_12, %c0_13] : memref<128x128xbf16, #tpu.memory_space<vmem>>, vector<128x128xbf16>
    %cst_14 = arith.constant dense<0.000000e+00> : vector<200x128xf32>
    %19 = tpu.matmul %17, %18, %cst_14 {dimension_numbers = #tpu.dot_dimension_numbers<[1], [0], [0], [1], [0, 0, 1, 1], [], []>} : vector<200x128xbf16>, vector<128x128xbf16>, vector<200x128xf32> -> vector<200x128xf32>
    %c0_15 = arith.constant 0 : index
    %c0_16 = arith.constant 0 : index
    %20 = vector.load %arg7[%c0_15, %c0_16] : memref<1x128xf32, #tpu.memory_space<vmem>>, vector<1x128xf32>
    %21 = vector.broadcast %20 : vector<1x128xf32> to vector<200x128xf32>
    %22 = arith.addf %19, %21 : vector<200x128xf32>
    %c0_17 = arith.constant 0 : index
    %c0_18 = arith.constant 0 : index
    %23 = vector.load %arg8[%c0_17, %c0_18] : memref<200x128xf32, #tpu.memory_space<vmem>>, vector<200x128xf32>
    tpu.vector_store %arg8[%c0_17, %c0_18], %22 {strides = array<i32>} : memref<200x128xf32, #tpu.memory_space<vmem>>, vector<200x128xf32>,
    return
  }
  func.func @transform_0(%arg0: i32) -> (i32, i32) {
    %c0_i32 = arith.constant 0 : i32
    %c0_i32_0 = arith.constant 0 : i32
    return %arg0, %c0_i32 : i32, i32
  }
  func.func @transform_1(%arg0: i32) -> (i32, i32) {
    %c0_i32 = arith.constant 0 : i32
    %c0_i32_0 = arith.constant 0 : i32
    %c0_i32_1 = arith.constant 0 : i32
    return %c0_i32, %c0_i32_0 : i32, i32
  }
  func.func @transform_2(%arg0: i32) -> (i32, i32) {
    %c0_i32 = arith.constant 0 : i32
    %c0_i32_0 = arith.constant 0 : i32
    %c0_i32_1 = arith.constant 0 : i32
    return %c0_i32, %c0_i32_0 : i32, i32
  }
  func.func @transform_3(%arg0: i32) -> (i32, i32) {
    %c0_i32 = arith.constant 0 : i32
    %c0_i32_0 = arith.constant 0 : i32
    %c0_i32_1 = arith.constant 0 : i32
    return %c0_i32, %c0_i32_0 : i32, i32
  }
  func.func @transform_4(%arg0: i32) -> (i32, i32) {
    %c0_i32 = arith.constant 0 : i32
    %c0_i32_0 = arith.constant 0 : i32
    %c0_i32_1 = arith.constant 0 : i32
    return %c0_i32, %c0_i32_0 : i32, i32
  }
  func.func @transform_5(%arg0: i32) -> (i32, i32) {
    %c0_i32 = arith.constant 0 : i32
    %c0_i32_0 = arith.constant 0 : i32
    %c0_i32_1 = arith.constant 0 : i32
    return %c0_i32, %c0_i32_0 : i32, i32
  }
  func.func @transform_6(%arg0: i32) -> (i32, i32) {
    %c0_i32 = arith.constant 0 : i32
    %c0_i32_0 = arith.constant 0 : i32
    %c0_i32_1 = arith.constant 0 : i32
    return %c0_i32, %c0_i32_0 : i32, i32
  }
  func.func @transform_7(%arg0: i32) -> (i32, i32) {
    %c0_i32 = arith.constant 0 : i32
    %c0_i32_0 = arith.constant 0 : i32
    return %arg0, %c0_i32 : i32, i32
  }
}

</mosaic_0001>

<llo_original>
// kernel: neural_net_forward.1
$region0: #{neural_net_forward.1}
  #allocation0 [shape = 'u32[]', space=smem, size = 0x4, offset = 0x4, fixed_abs, tag = 'smem constant byte address 0x4 - core index']
  #allocation1 [shape = 'u32[144,128]{1,0:T(1,128)}', space=vmem, size = 0x12000, scoped, tag = 'internal scratch']
  %s0 = inlined_call_operand.vmem [shape: f32[200,64], index: 0, kind: input, shape index: {}]
  %s1 = inlined_call_operand.vmem [shape: bf16[64,128], index: 1, kind: input, shape index: {}]
  %s2 = inlined_call_operand.vmem [shape: f32[1,128], index: 2, kind: input, shape index: {}]
  %s3 = inlined_call_operand.vmem [shape: bf16[128,128], index: 3, kind: input, shape index: {}]
  %s4 = inlined_call_operand.vmem [shape: f32[1,128], index: 4, kind: input, shape index: {}]
  %s5 = inlined_call_operand.vmem [shape: bf16[128,128], index: 5, kind: input, shape index: {}]
  %s6 = inlined_call_operand.vmem [shape: f32[1,128], index: 6, kind: input, shape index: {}]
  %s7 = inlined_call_operand.vmem [shape: f32[200,128], index: 7, kind: output, shape index: {}]
  %s8 = sld [smem:[#allocation0]]
  $region38: #{neural_net_forward.1} parent=0
    _
  %s10 = ssub.s32 1, %s8
  %s11 = scalar_select 0, %s10, %s8
  // Predicated region
  $region2: #{neural_net_forward.1} parent=0 // pred_check
    _
  $region3: #{neural_net_forward.1} parent=0 // pred_check_branch
    %13 = sbr.rel (0) target = $region5
  $region4: #{neural_net_forward.1} parent=0 // pred_region
    _
  $region5: #{neural_net_forward.1} parent=0 // pred_fallthru
    _
  // Predicated region
  $region6: #{neural_net_forward.1} parent=0 // pred_check
    _
  $region7: #{neural_net_forward.1} parent=0 // pred_check_branch
    %15 = sbr.rel (0) target = $region9
  $region8: #{neural_net_forward.1} parent=0 // pred_region
    _
  $region9: #{neural_net_forward.1} parent=0 // pred_fallthru
    _
  // Predicated region
  $region10: #{neural_net_forward.1} parent=0 // pred_check
    _
  $region11: #{neural_net_forward.1} parent=0 // pred_check_branch
    %17 = sbr.rel (0) target = $region13
  $region12: #{neural_net_forward.1} parent=0 // pred_region
    _
  $region13: #{neural_net_forward.1} parent=0 // pred_fallthru
    _
  // Predicated region
  $region14: #{neural_net_forward.1} parent=0 // pred_check
    _
  $region15: #{neural_net_forward.1} parent=0 // pred_check_branch
    %19 = sbr.rel (0) target = $region17
  $region16: #{neural_net_forward.1} parent=0 // pred_region
    _
  $region17: #{neural_net_forward.1} parent=0 // pred_fallthru
    _
  // Predicated region
  $region18: #{neural_net_forward.1} parent=0 // pred_check
    _
  $region19: #{neural_net_forward.1} parent=0 // pred_check_branch
    %21 = sbr.rel (0) target = $region21
  $region20: #{neural_net_forward.1} parent=0 // pred_region
    _
  $region21: #{neural_net_forward.1} parent=0 // pred_fallthru
    _
  // Predicated region
  $region22: #{neural_net_forward.1} parent=0 // pred_check
    _
  $region23: #{neural_net_forward.1} parent=0 // pred_check_branch
    %23 = sbr.rel (0) target = $region25
  $region24: #{neural_net_forward.1} parent=0 // pred_region
    _
  $region25: #{neural_net_forward.1} parent=0 // pred_fallthru
    _
  // Predicated region
  $region26: #{neural_net_forward.1} parent=0 // pred_check
    _
  $region27: #{neural_net_forward.1} parent=0 // pred_check_branch
    %25 = sbr.rel (0) target = $region29
  $region28: #{neural_net_forward.1} parent=0 // pred_region
    _
  $region29: #{neural_net_forward.1} parent=0 // pred_fallthru
    _
  %v27 = vld [vmem:[%s0] sm:$0xff]
  %v28 = vld [vmem:[%s0 + $0x8] sm:$0xff]
  %v29 = vld [vmem:[%s0 + $0x10] sm:$0xff]
  %v30 = vld [vmem:[%s0 + $0x18] sm:$0xff]
  %v31 = vld [vmem:[%s0 + $0x20] sm:$0xff]
  %v32 = vld [vmem:[%s0 + $0x28] sm:$0xff]
  %v33 = vld [vmem:[%s0 + $0x30] sm:$0xff]
  %v34 = vld [vmem:[%s0 + $0x38] sm:$0xff]
  %v35 = vld [vmem:[%s0 + $0x40] sm:$0xff]
  %v36 = vld [vmem:[%s0 + $0x48] sm:$0xff]
  %v37 = vld [vmem:[%s0 + $0x50] sm:$0xff]
  %v38 = vld [vmem:[%s0 + $0x58] sm:$0xff]
  %v39 = vld [vmem:[%s0 + $0x60] sm:$0xff]
  %v40 = vld [vmem:[%s0 + $0x68] sm:$0xff]
  %v41 = vld [vmem:[%s0 + $0x70] sm:$0xff]
  %v42 = vld [vmem:[%s0 + $0x78] sm:$0xff]
  %v43 = vld [vmem:[%s0 + $0x80] sm:$0xff]
  %v44 = vld [vmem:[%s0 + $0x88] sm:$0xff]
  %v45 = vld [vmem:[%s0 + $0x90] sm:$0xff]
  %v46 = vld [vmem:[%s0 + $0x98] sm:$0xff]
  %v47 = vld [vmem:[%s0 + $0xa0] sm:$0xff]
  %v48 = vld [vmem:[%s0 + $0xa8] sm:$0xff]
  %v49 = vld [vmem:[%s0 + $0xb0] sm:$0xff]
  %v50 = vld [vmem:[%s0 + $0xb8] sm:$0xff]
  %v51 = vld [vmem:[%s0 + $0xc0] sm:$0xff]
  %v52 = vpack.c.bf16 %v28, %v27
  %v53 = vpack.c.bf16 %v30, %v29
  %v54 = vpack.c.bf16 %v32, %v31
  %v55 = vpack.c.bf16 %v34, %v33
  %v56 = vpack.c.bf16 %v36, %v35
  %v57 = vpack.c.bf16 %v38, %v37
  %v58 = vpack.c.bf16 %v40, %v39
  %v59 = vpack.c.bf16 %v42, %v41
  %v60 = vpack.c.bf16 %v44, %v43
  %v61 = vpack.c.bf16 %v46, %v45
  %v62 = vpack.c.bf16 %v48, %v47
  %v63 = vpack.c.bf16 %v50, %v49
  %v64 = vpack.c.bf16 %v51, %v51
  %v65 = vld [vmem:[%s1] sm:$0xf]
  %v66 = vld [vmem:[%s1 + $0x4] sm:$0xf]
  %v67 = vld [vmem:[%s1 + $0x8] sm:$0xf]
  %v68 = vld [vmem:[%s1 + $0xc] sm:$0xf]
  %v69 = vld [vmem:[%s1 + $0x10] sm:$0xf]
  %v70 = vld [vmem:[%s1 + $0x14] sm:$0xf]
  %v71 = vld [vmem:[%s1 + $0x18] sm:$0xf]
  %v72 = vld [vmem:[%s1 + $0x1c] sm:$0xf]
  %v73 = vld [vmem:[%s2] sm:$0x1]
  %v75 = vlaneseq
  %v76 = vshrl.u32 %v75, 7
  %v77 = vsub.s32 0, %v76
  %v78 = vrot.slane %v73, %v77
  %v88 = vunpack.c.l.b16 %v65
  %v89 = vunpack.c.l.b16 %v66
  %v90 = vunpack.c.l.b16 %v67
  %v91 = vunpack.c.l.b16 %v68
  %v92 = vunpack.c.l.b16 %v69
  %v93 = vunpack.c.l.b16 %v70
  %v94 = vunpack.c.l.b16 %v71
  %v95 = vunpack.c.l.b16 %v72
  %v96 = vpack.c.b16 %v89, %v88
  %v97 = vpack.c.b16 %v91, %v90
  %v98 = vpack.c.b16 %v93, %v92
  %v99 = vpack.c.b16 %v95, %v94
  %vm104 = vcmask 523264
  %v106 = vsel %vm104, %v52, 0
  %v109 = vsel %vm104, %v53, 0
  %v112 = vsel %vm104, %v54, 0
  %v115 = vsel %vm104, %v55, 0
  %v118 = vsel %vm104, %v56, 0
  %v121 = vsel %vm104, %v57, 0
  %v124 = vsel %vm104, %v58, 0
  %v127 = vsel %vm104, %v59, 0
  %v130 = vsel %vm104, %v60, 0
  %v133 = vsel %vm104, %v61, 0
  %v136 = vsel %vm104, %v62, 0
  %v139 = vsel %vm104, %v63, 0
  %v142 = vsel %vm104, %v64, 0
  %144 = vmatprep.subr.bf16.mxu0 0
  %145 = vmatpush1.bf16.msra.mxu0 0
  %146 = vmatprep.subr.bf16.mxu0 0
  %147 = vmatpush1.bf16.msra.mxu0 0
  %148 = vmatprep.subr.bf16.mxu0 0
  %149 = vmatpush1.bf16.msra.mxu0 0
  %150 = vmatprep.subr.bf16.mxu0 0
  %151 = vmatpush1.bf16.msra.mxu0 0
  %152 = vmatprep.subr.bf16.mxu0 0
  %153 = vmatpush1.bf16.msra.mxu0 %v99
  %154 = vmatprep.subr.bf16.mxu0 0
  %155 = vmatpush1.bf16.msra.mxu0 %v98
  %156 = vmatprep.subr.bf16.mxu0 0
  %157 = vmatpush1.bf16.msra.mxu0 %v97
  %158 = vmatprep.subr.bf16.mxu0 0
  %159 = vmatpush1.bf16.msra.mxu0 %v96
  %160 = vmatprep.subr.bf16.mxu0 0
  %161 = vmatpush2.bf16.msra.mxu0 0
  %162 = vmatprep.subr.bf16.mxu0 0
  %163 = vmatpush2.bf16.msra.mxu0 0
  %164 = vmatprep.subr.bf16.mxu0 0
  %165 = vmatpush2.bf16.msra.mxu0 0
  %166 = vmatprep.subr.bf16.mxu0 0
  %167 = vmatpush2.bf16.msra.mxu0 0
  %168 = vmatprep.subr.bf16.mxu0 0
  %169 = vmatpush2.bf16.msra.mxu0 0
  %170 = vmatprep.subr.bf16.mxu0 0
  %171 = vmatpush2.bf16.msra.mxu0 0
  %172 = vmatprep.subr.bf16.mxu0 0
  %173 = vmatpush2.bf16.msra.mxu0 0
  %174 = vmatprep.subr.bf16.mxu0 0
  %175 = vmatpush2.bf16.msra.mxu0 0
  %176 = vmatprep.mubr.bf16.mxu0 0
  %177 = vmatmul.mubr.bf16.gmra.mxu0 %v106
  %v178 = vpop.f32.mrf.mxu0
  %v179 = vadd.f32 %v78, %v178
  %v180 = vpop.f32.mrf.mxu0
  %v181 = vpop.f32.mrf.mxu0
  %v182 = vadd.f32 %v78, %v181
  %v183 = vpop.f32.mrf.mxu0
  %184 = vmatprep.mubr.bf16.mxu0 0
  %185 = vmatmul.mubr.bf16.gmra.mxu0 %v109
  %v186 = vpop.f32.mrf.mxu0
  %v187 = vadd.f32 %v78, %v186
  %v188 = vpop.f32.mrf.mxu0
  %v189 = vpop.f32.mrf.mxu0
  %v190 = vadd.f32 %v78, %v189
  %v191 = vpop.f32.mrf.mxu0
  %192 = vmatprep.mubr.bf16.mxu0 0
  %193 = vmatmul.mubr.bf16.gmra.mxu0 %v112
  %v194 = vpop.f32.mrf.mxu0
  %v195 = vadd.f32 %v78, %v194
  %v196 = vpop.f32.mrf.mxu0
  %v197 = vpop.f32.mrf.mxu0
  %v198 = vadd.f32 %v78, %v197
  %v199 = vpop.f32.mrf.mxu0
  %200 = vmatprep.mubr.bf16.mxu0 0
  %201 = vmatmul.mubr.bf16.gmra.mxu0 %v115
  %v202 = vpop.f32.mrf.mxu0
  %v203 = vadd.f32 %v78, %v202
  %v204 = vpop.f32.mrf.mxu0
  %v205 = vpop.f32.mrf.mxu0
  %v206 = vadd.f32 %v78, %v205
  %v207 = vpop.f32.mrf.mxu0
  %208 = vmatprep.mubr.bf16.mxu0 0
  %209 = vmatmul.mubr.bf16.gmra.mxu0 %v118
  %v210 = vpop.f32.mrf.mxu0
  %v211 = vadd.f32 %v78, %v210
  %v212 = vpop.f32.mrf.mxu0
  %v213 = vpop.f32.mrf.mxu0
  %v214 = vadd.f32 %v78, %v213
  %v215 = vpop.f32.mrf.mxu0
  %216 = vmatprep.mubr.bf16.mxu0 0
  %217 = vmatmul.mubr.bf16.gmra.mxu0 %v121
  %v218 = vpop.f32.mrf.mxu0
  %v219 = vadd.f32 %v78, %v218
  %v220 = vpop.f32.mrf.mxu0
  %v221 = vpop.f32.mrf.mxu0
  %v222 = vadd.f32 %v78, %v221
  %v223 = vpop.f32.mrf.mxu0
  %224 = vmatprep.mubr.bf16.mxu0 0
  %225 = vmatmul.mubr.bf16.gmra.mxu0 %v124
  %v226 = vpop.f32.mrf.mxu0
  %v227 = vadd.f32 %v78, %v226
  %v228 = vpop.f32.mrf.mxu0
  %v229 = vpop.f32.mrf.mxu0
  %v230 = vadd.f32 %v78, %v229
  %v231 = vpop.f32.mrf.mxu0
  %232 = vmatprep.mubr.bf16.mxu0 0
  %233 = vmatmul.mubr.bf16.gmra.mxu0 %v127
  %v234 = vpop.f32.mrf.mxu0
  %v235 = vadd.f32 %v78, %v234
  %v236 = vpop.f32.mrf.mxu0
  %v237 = vpop.f32.mrf.mxu0
  %v238 = vadd.f32 %v78, %v237
  %v239 = vpop.f32.mrf.mxu0
  %240 = vmatprep.mubr.bf16.mxu0 0
  %241 = vmatmul.mubr.bf16.gmra.mxu0 %v130
  %v242 = vpop.f32.mrf.mxu0
  %v243 = vadd.f32 %v78, %v242
  %v244 = vpop.f32.mrf.mxu0
  %v245 = vpop.f32.mrf.mxu0
  %v246 = vadd.f32 %v78, %v245
  %v247 = vpop.f32.mrf.mxu0
  %248 = vmatprep.mubr.bf16.mxu0 0
  %249 = vmatmul.mubr.bf16.gmra.mxu0 %v133
  %v250 = vpop.f32.mrf.mxu0
  %v251 = vadd.f32 %v78, %v250
  %v252 = vpop.f32.mrf.mxu0
  %v253 = vpop.f32.mrf.mxu0
  %v254 = vadd.f32 %v78, %v253
  %v255 = vpop.f32.mrf.mxu0
  %256 = vmatprep.mubr.bf16.mxu0 0
  %257 = vmatmul.mubr.bf16.gmra.mxu0 %v136
  %v258 = vpop.f32.mrf.mxu0
  %v259 = vadd.f32 %v78, %v258
  %v260 = vpop.f32.mrf.mxu0
  %v261 = vpop.f32.mrf.mxu0
  %v262 = vadd.f32 %v78, %v261
  %v263 = vpop.f32.mrf.mxu0
  %264 = vmatprep.mubr.bf16.mxu0 0
  %265 = vmatmul.mubr.bf16.gmra.mxu0 %v139
  %v266 = vpop.f32.mrf.mxu0
  %v267 = vadd.f32 %v78, %v266
  %v268 = vpop.f32.mrf.mxu0
  %v269 = vpop.f32.mrf.mxu0
  %v270 = vadd.f32 %v78, %v269
  %v271 = vpop.f32.mrf.mxu0
  %272 = vmatprep.mubr.bf16.mxu0 0
  %273 = vmatmul.mubr.bf16.gmra.mxu0 %v142
  %v274 = vpop.f32.mrf.mxu0
  %v275 = vadd.f32 %v78, %v274
  %v276 = vpop.f32.mrf.mxu0
  %v277 = vpop.f32.mrf.mxu0
  %v278 = vpop.f32.mrf.mxu0
  %279 = vdwg.mxu0
  %v280 = vpack.c.bf16 %v182, %v179
  %v281 = vpack.c.bf16 %v190, %v187
  %v282 = vpack.c.bf16 %v198, %v195
  %v283 = vpack.c.bf16 %v206, %v203
  %v284 = vpack.c.bf16 %v214, %v211
  %v285 = vpack.c.bf16 %v222, %v219
  %v286 = vpack.c.bf16 %v230, %v227
  %v287 = vpack.c.bf16 %v238, %v235
  %v288 = vpack.c.bf16 %v246, %v243
  %v289 = vpack.c.bf16 %v254, %v251
  %v290 = vpack.c.bf16 %v262, %v259
  %v291 = vpack.c.bf16 %v270, %v267
  %v292 = vpack.c.bf16 %v275, %v275
  %v293 = vmax.bf16 %v280, 0
  %v294 = vmax.bf16 %v281, 0
  %v295 = vmax.bf16 %v282, 0
  %v296 = vmax.bf16 %v283, 0
  %v297 = vmax.bf16 %v284, 0
  %v298 = vmax.bf16 %v285, 0
  %v299 = vmax.bf16 %v286, 0
  %v300 = vmax.bf16 %v287, 0
  %v301 = vmax.bf16 %v288, 0
  %v302 = vmax.bf16 %v289, 0
  %v303 = vmax.bf16 %v290, 0
  %v304 = vmax.bf16 %v291, 0
  %v305 = vmax.bf16 %v292, 0
  %v306 = vld [vmem:[%s3] sm:$0xf]
  %v307 = vld [vmem:[%s3 + $0x4] sm:$0xf]
  %v308 = vld [vmem:[%s3 + $0x8] sm:$0xf]
  %v309 = vld [vmem:[%s3 + $0xc] sm:$0xf]
  %v310 = vld [vmem:[%s3 + $0x10] sm:$0xf]
  %v311 = vld [vmem:[%s3 + $0x14] sm:$0xf]
  %v312 = vld [vmem:[%s3 + $0x18] sm:$0xf]
  %v313 = vld [vmem:[%s3 + $0x1c] sm:$0xf]
  %v314 = vld [vmem:[%s3 + $0x20] sm:$0xf]
  %v315 = vld [vmem:[%s3 + $0x24] sm:$0xf]
  %v316 = vld [vmem:[%s3 + $0x28] sm:$0xf]
  %v317 = vld [vmem:[%s3 + $0x2c] sm:$0xf]
  %v318 = vld [vmem:[%s3 + $0x30] sm:$0xf]
  %v319 = vld [vmem:[%s3 + $0x34] sm:$0xf]
  %v320 = vld [vmem:[%s3 + $0x38] sm:$0xf]
  %v321 = vld [vmem:[%s3 + $0x3c] sm:$0xf]
  %v322 = vld [vmem:[%s4] sm:$0x1]
  %v324 = vlaneseq
  %v325 = vshrl.u32 %v324, 7
  %v326 = vsub.s32 0, %v325
  %v327 = vrot.slane %v322, %v326
  %v345 = vunpack.c.l.b16 %v306
  %v346 = vunpack.c.l.b16 %v307
  %v347 = vunpack.c.l.b16 %v308
  %v348 = vunpack.c.l.b16 %v309
  %v349 = vunpack.c.l.b16 %v310
  %v350 = vunpack.c.l.b16 %v311
  %v351 = vunpack.c.l.b16 %v312
  %v352 = vunpack.c.l.b16 %v313
  %v353 = vunpack.c.l.b16 %v314
  %v354 = vunpack.c.l.b16 %v315
  %v355 = vunpack.c.l.b16 %v316
  %v356 = vunpack.c.l.b16 %v317
  %v357 = vunpack.c.l.b16 %v318
  %v358 = vunpack.c.l.b16 %v319
  %v359 = vunpack.c.l.b16 %v320
  %v360 = vunpack.c.l.b16 %v321
  %v361 = vpack.c.b16 %v346, %v345
  %v362 = vpack.c.b16 %v348, %v347
  %v363 = vpack.c.b16 %v350, %v349
  %v364 = vpack.c.b16 %v352, %v351
  %v365 = vpack.c.b16 %v354, %v353
  %v366 = vpack.c.b16 %v356, %v355
  %v367 = vpack.c.b16 %v358, %v357
  %v368 = vpack.c.b16 %v360, %v359
  %377 = vmatprep.subr.bf16.mxu0 0
  %378 = vmatpush1.bf16.msra.mxu0 %v368
  %379 = vmatprep.subr.bf16.mxu0 0
  %380 = vmatpush1.bf16.msra.mxu0 %v367
  %381 = vmatprep.subr.bf16.mxu0 0
  %382 = vmatpush1.bf16.msra.mxu0 %v366
  %383 = vmatprep.subr.bf16.mxu0 0
  %384 = vmatpush1.bf16.msra.mxu0 %v365
  %385 = vmatprep.subr.bf16.mxu0 0
  %386 = vmatpush1.bf16.msra.mxu0 %v364
  %387 = vmatprep.subr.bf16.mxu0 0
  %388 = vmatpush1.bf16.msra.mxu0 %v363
  %389 = vmatprep.subr.bf16.mxu0 0
  %390 = vmatpush1.bf16.msra.mxu0 %v362
  %391 = vmatprep.subr.bf16.mxu0 0
  %392 = vmatpush1.bf16.msra.mxu0 %v361
  %393 = vmatprep.subr.bf16.mxu0 0
  %394 = vmatpush2.bf16.msra.mxu0 0
  %395 = vmatprep.subr.bf16.mxu0 0
  %396 = vmatpush2.bf16.msra.mxu0 0
  %397 = vmatprep.subr.bf16.mxu0 0
  %398 = vmatpush2.bf16.msra.mxu0 0
  %399 = vmatprep.subr.bf16.mxu0 0
  %400 = vmatpush2.bf16.msra.mxu0 0
  %401 = vmatprep.subr.bf16.mxu0 0
  %402 = vmatpush2.bf16.msra.mxu0 0
  %403 = vmatprep.subr.bf16.mxu0 0
  %404 = vmatpush2.bf16.msra.mxu0 0
  %405 = vmatprep.subr.bf16.mxu0 0
  %406 = vmatpush2.bf16.msra.mxu0 0
  %407 = vmatprep.subr.bf16.mxu0 0
  %408 = vmatpush2.bf16.msra.mxu0 0
  %409 = vmatprep.mubr.bf16.mxu0 0
  %410 = vmatmul.mubr.bf16.gmra.mxu0 %v293
  %v411 = vpop.f32.mrf.mxu0
  %v412 = vadd.f32 %v327, %v411
  %v413 = vpop.f32.mrf.mxu0
  %v414 = vpop.f32.mrf.mxu0
  %v415 = vadd.f32 %v327, %v414
  %v416 = vpop.f32.mrf.mxu0
  %417 = vmatprep.mubr.bf16.mxu0 0
  %418 = vmatmul.mubr.bf16.gmra.mxu0 %v294
  %v419 = vpop.f32.mrf.mxu0
  %v420 = vadd.f32 %v327, %v419
  %v421 = vpop.f32.mrf.mxu0
  %v422 = vpop.f32.mrf.mxu0
  %v423 = vadd.f32 %v327, %v422
  %v424 = vpop.f32.mrf.mxu0
  %425 = vmatprep.mubr.bf16.mxu0 0
  %426 = vmatmul.mubr.bf16.gmra.mxu0 %v295
  %v427 = vpop.f32.mrf.mxu0
  %v428 = vadd.f32 %v327, %v427
  %v429 = vpop.f32.mrf.mxu0
  %v430 = vpop.f32.mrf.mxu0
  %v431 = vadd.f32 %v327, %v430
  %v432 = vpop.f32.mrf.mxu0
  %433 = vmatprep.mubr.bf16.mxu0 0
  %434 = vmatmul.mubr.bf16.gmra.mxu0 %v296
  %v435 = vpop.f32.mrf.mxu0
  %v436 = vadd.f32 %v327, %v435
  %v437 = vpop.f32.mrf.mxu0
  %v438 = vpop.f32.mrf.mxu0
  %v439 = vadd.f32 %v327, %v438
  %v440 = vpop.f32.mrf.mxu0
  %441 = vmatprep.mubr.bf16.mxu0 0
  %442 = vmatmul.mubr.bf16.gmra.mxu0 %v297
  %v443 = vpop.f32.mrf.mxu0
  %v444 = vadd.f32 %v327, %v443
  %v445 = vpop.f32.mrf.mxu0
  %v446 = vpop.f32.mrf.mxu0
  %v447 = vadd.f32 %v327, %v446
  %v448 = vpop.f32.mrf.mxu0
  %449 = vmatprep.mubr.bf16.mxu0 0
  %450 = vmatmul.mubr.bf16.gmra.mxu0 %v298
  %v451 = vpop.f32.mrf.mxu0
  %v452 = vadd.f32 %v327, %v451
  %v453 = vpop.f32.mrf.mxu0
  %v454 = vpop.f32.mrf.mxu0
  %v455 = vadd.f32 %v327, %v454
  %v456 = vpop.f32.mrf.mxu0
  %457 = vmatprep.mubr.bf16.mxu0 0
  %458 = vmatmul.mubr.bf16.gmra.mxu0 %v299
  %v459 = vpop.f32.mrf.mxu0
  %v460 = vadd.f32 %v327, %v459
  %v461 = vpop.f32.mrf.mxu0
  %v462 = vpop.f32.mrf.mxu0
  %v463 = vadd.f32 %v327, %v462
  %v464 = vpop.f32.mrf.mxu0
  %465 = vmatprep.mubr.bf16.mxu0 0
  %466 = vmatmul.mubr.bf16.gmra.mxu0 %v300
  %v467 = vpop.f32.mrf.mxu0
  %v468 = vadd.f32 %v327, %v467
  %v469 = vpop.f32.mrf.mxu0
  %v470 = vpop.f32.mrf.mxu0
  %v471 = vadd.f32 %v327, %v470
  %v472 = vpop.f32.mrf.mxu0
  %473 = vmatprep.mubr.bf16.mxu0 0
  %474 = vmatmul.mubr.bf16.gmra.mxu0 %v301
  %v475 = vpop.f32.mrf.mxu0
  %v476 = vadd.f32 %v327, %v475
  %v477 = vpop.f32.mrf.mxu0
  %v478 = vpop.f32.mrf.mxu0
  %v479 = vadd.f32 %v327, %v478
  %v480 = vpop.f32.mrf.mxu0
  %481 = vmatprep.mubr.bf16.mxu0 0
  %482 = vmatmul.mubr.bf16.gmra.mxu0 %v302
  %v483 = vpop.f32.mrf.mxu0
  %v484 = vadd.f32 %v327, %v483
  %v485 = vpop.f32.mrf.mxu0
  %v486 = vpop.f32.mrf.mxu0
  %v487 = vadd.f32 %v327, %v486
  %v488 = vpop.f32.mrf.mxu0
  %489 = vmatprep.mubr.bf16.mxu0 0
  %490 = vmatmul.mubr.bf16.gmra.mxu0 %v303
  %v491 = vpop.f32.mrf.mxu0
  %v492 = vadd.f32 %v327, %v491
  %v493 = vpop.f32.mrf.mxu0
  %v494 = vpop.f32.mrf.mxu0
  %v495 = vadd.f32 %v327, %v494
  %v496 = vpop.f32.mrf.mxu0
  %497 = vmatprep.mubr.bf16.mxu0 0
  %498 = vmatmul.mubr.bf16.gmra.mxu0 %v304
  %v499 = vpop.f32.mrf.mxu0
  %v500 = vadd.f32 %v327, %v499
  %v501 = vpop.f32.mrf.mxu0
  %v502 = vpop.f32.mrf.mxu0
  %v503 = vadd.f32 %v327, %v502
  %v504 = vpop.f32.mrf.mxu0
  %505 = vmatprep.mubr.bf16.mxu0 0
  %506 = vmatmul.mubr.bf16.gmra.mxu0 %v305
  %v507 = vpop.f32.mrf.mxu0
  %v508 = vadd.f32 %v327, %v507
  %v509 = vpop.f32.mrf.mxu0
  %v510 = vpop.f32.mrf.mxu0
  %v511 = vpop.f32.mrf.mxu0
  %512 = vdwg.mxu0
  %v513 = vpack.c.bf16 %v415, %v412
  %v514 = vpack.c.bf16 %v423, %v420
  %v515 = vpack.c.bf16 %v431, %v428
  %v516 = vpack.c.bf16 %v439, %v436
  %v517 = vpack.c.bf16 %v447, %v444
  %v518 = vpack.c.bf16 %v455, %v452
  %v519 = vpack.c.bf16 %v463, %v460
  %v520 = vpack.c.bf16 %v471, %v468
  %v521 = vpack.c.bf16 %v479, %v476
  %v522 = vpack.c.bf16 %v487, %v484
  %v523 = vpack.c.bf16 %v495, %v492
  %v524 = vpack.c.bf16 %v503, %v500
  %v525 = vpack.c.bf16 %v508, %v508
  %v526 = vmax.bf16 %v513, 0
  %v527 = vmax.bf16 %v514, 0
  %v528 = vmax.bf16 %v515, 0
  %v529 = vmax.bf16 %v516, 0
  %v530 = vmax.bf16 %v517, 0
  %v531 = vmax.bf16 %v518, 0
  %v532 = vmax.bf16 %v519, 0
  %v533 = vmax.bf16 %v520, 0
  %v534 = vmax.bf16 %v521, 0
  %v535 = vmax.bf16 %v522, 0
  %v536 = vmax.bf16 %v523, 0
  %v537 = vmax.bf16 %v524, 0
  %v538 = vmax.bf16 %v525, 0
  %v539 = vld [vmem:[%s5] sm:$0xf]
  %v540 = vld [vmem:[%s5 + $0x4] sm:$0xf]
  %v541 = vld [vmem:[%s5 + $0x8] sm:$0xf]
  %v542 = vld [vmem:[%s5 + $0xc] sm:$0xf]
  %v543 = vld [vmem:[%s5 + $0x10] sm:$0xf]
  %v544 = vld [vmem:[%s5 + $0x14] sm:$0xf]
  %v545 = vld [vmem:[%s5 + $0x18] sm:$0xf]
  %v546 = vld [vmem:[%s5 + $0x1c] sm:$0xf]
  %v547 = vld [vmem:[%s5 + $0x20] sm:$0xf]
  %v548 = vld [vmem:[%s5 + $0x24] sm:$0xf]
  %v549 = vld [vmem:[%s5 + $0x28] sm:$0xf]
  %v550 = vld [vmem:[%s5 + $0x2c] sm:$0xf]
  %v551 = vld [vmem:[%s5 + $0x30] sm:$0xf]
  %v552 = vld [vmem:[%s5 + $0x34] sm:$0xf]
  %v553 = vld [vmem:[%s5 + $0x38] sm:$0xf]
  %v554 = vld [vmem:[%s5 + $0x3c] sm:$0xf]
  %v555 = vld [vmem:[%s6] sm:$0x1]
  %v557 = vlaneseq
  %v558 = vshrl.u32 %v557, 7
  %v559 = vsub.s32 0, %v558
  %v560 = vrot.slane %v555, %v559
  %v578 = vunpack.c.l.b16 %v539
  %v579 = vunpack.c.l.b16 %v540
  %v580 = vunpack.c.l.b16 %v541
  %v581 = vunpack.c.l.b16 %v542
  %v582 = vunpack.c.l.b16 %v543
  %v583 = vunpack.c.l.b16 %v544
  %v584 = vunpack.c.l.b16 %v545
  %v585 = vunpack.c.l.b16 %v546
  %v586 = vunpack.c.l.b16 %v547
  %v587 = vunpack.c.l.b16 %v548
  %v588 = vunpack.c.l.b16 %v549
  %v589 = vunpack.c.l.b16 %v550
  %v590 = vunpack.c.l.b16 %v551
  %v591 = vunpack.c.l.b16 %v552
  %v592 = vunpack.c.l.b16 %v553
  %v593 = vunpack.c.l.b16 %v554
  %v594 = vpack.c.b16 %v579, %v578
  %v595 = vpack.c.b16 %v581, %v580
  %v596 = vpack.c.b16 %v583, %v582
  %v597 = vpack.c.b16 %v585, %v584
  %v598 = vpack.c.b16 %v587, %v586
  %v599 = vpack.c.b16 %v589, %v588
  %v600 = vpack.c.b16 %v591, %v590
  %v601 = vpack.c.b16 %v593, %v592
  %610 = vmatprep.subr.bf16.mxu0 0
  %611 = vmatpush1.bf16.msra.mxu0 %v601
  %612 = vmatprep.subr.bf16.mxu0 0
  %613 = vmatpush1.bf16.msra.mxu0 %v600
  %614 = vmatprep.subr.bf16.mxu0 0
  %615 = vmatpush1.bf16.msra.mxu0 %v599
  %616 = vmatprep.subr.bf16.mxu0 0
  %617 = vmatpush1.bf16.msra.mxu0 %v598
  %618 = vmatprep.subr.bf16.mxu0 0
  %619 = vmatpush1.bf16.msra.mxu0 %v597
  %620 = vmatprep.subr.bf16.mxu0 0
  %621 = vmatpush1.bf16.msra.mxu0 %v596
  %622 = vmatprep.subr.bf16.mxu0 0
  %623 = vmatpush1.bf16.msra.mxu0 %v595
  %624 = vmatprep.subr.bf16.mxu0 0
  %625 = vmatpush1.bf16.msra.mxu0 %v594
  %626 = vmatprep.subr.bf16.mxu0 0
  %627 = vmatpush2.bf16.msra.mxu0 0
  %628 = vmatprep.subr.bf16.mxu0 0
  %629 = vmatpush2.bf16.msra.mxu0 0
  %630 = vmatprep.subr.bf16.mxu0 0
  %631 = vmatpush2.bf16.msra.mxu0 0
  %632 = vmatprep.subr.bf16.mxu0 0
  %633 = vmatpush2.bf16.msra.mxu0 0
  %634 = vmatprep.subr.bf16.mxu0 0
  %635 = vmatpush2.bf16.msra.mxu0 0
  %636 = vmatprep.subr.bf16.mxu0 0
  %637 = vmatpush2.bf16.msra.mxu0 0
  %638 = vmatprep.subr.bf16.mxu0 0
  %639 = vmatpush2.bf16.msra.mxu0 0
  %640 = vmatprep.subr.bf16.mxu0 0
  %641 = vmatpush2.bf16.msra.mxu0 0
  %642 = vmatprep.mubr.bf16.mxu0 0
  %643 = vmatmul.mubr.bf16.gmra.mxu0 %v526
  %v644 = vpop.f32.mrf.mxu0
  %v645 = vadd.f32 %v560, %v644
  %v646 = vpop.f32.mrf.mxu0
  %v647 = vpop.f32.mrf.mxu0
  %v648 = vadd.f32 %v560, %v647
  %v649 = vpop.f32.mrf.mxu0
  %650 = vmatprep.mubr.bf16.mxu0 0
  %651 = vmatmul.mubr.bf16.gmra.mxu0 %v527
  %v652 = vpop.f32.mrf.mxu0
  %v653 = vadd.f32 %v560, %v652
  %v654 = vpop.f32.mrf.mxu0
  %v655 = vpop.f32.mrf.mxu0
  %v656 = vadd.f32 %v560, %v655
  %v657 = vpop.f32.mrf.mxu0
  %658 = vmatprep.mubr.bf16.mxu0 0
  %659 = vmatmul.mubr.bf16.gmra.mxu0 %v528
  %v660 = vpop.f32.mrf.mxu0
  %v661 = vadd.f32 %v560, %v660
  %v662 = vpop.f32.mrf.mxu0
  %v663 = vpop.f32.mrf.mxu0
  %v664 = vadd.f32 %v560, %v663
  %v665 = vpop.f32.mrf.mxu0
  %666 = vmatprep.mubr.bf16.mxu0 0
  %667 = vmatmul.mubr.bf16.gmra.mxu0 %v529
  %v668 = vpop.f32.mrf.mxu0
  %v669 = vadd.f32 %v560, %v668
  %v670 = vpop.f32.mrf.mxu0
  %v671 = vpop.f32.mrf.mxu0
  %v672 = vadd.f32 %v560, %v671
  %v673 = vpop.f32.mrf.mxu0
  %674 = vmatprep.mubr.bf16.mxu0 0
  %675 = vmatmul.mubr.bf16.gmra.mxu0 %v530
  %v676 = vpop.f32.mrf.mxu0
  %v677 = vadd.f32 %v560, %v676
  %v678 = vpop.f32.mrf.mxu0
  %v679 = vpop.f32.mrf.mxu0
  %v680 = vadd.f32 %v560, %v679
  %v681 = vpop.f32.mrf.mxu0
  %682 = vmatprep.mubr.bf16.mxu0 0
  %683 = vmatmul.mubr.bf16.gmra.mxu0 %v531
  %v684 = vpop.f32.mrf.mxu0
  %v685 = vadd.f32 %v560, %v684
  %v686 = vpop.f32.mrf.mxu0
  %v687 = vpop.f32.mrf.mxu0
  %v688 = vadd.f32 %v560, %v687
  %v689 = vpop.f32.mrf.mxu0
  %690 = vmatprep.mubr.bf16.mxu0 0
  %691 = vmatmul.mubr.bf16.gmra.mxu0 %v532
  %v692 = vpop.f32.mrf.mxu0
  %v693 = vadd.f32 %v560, %v692
  %v694 = vpop.f32.mrf.mxu0
  %v695 = vpop.f32.mrf.mxu0
  %v696 = vadd.f32 %v560, %v695
  %v697 = vpop.f32.mrf.mxu0
  %698 = vmatprep.mubr.bf16.mxu0 0
  %699 = vmatmul.mubr.bf16.gmra.mxu0 %v533
  %v700 = vpop.f32.mrf.mxu0
  %v701 = vadd.f32 %v560, %v700
  %v702 = vpop.f32.mrf.mxu0
  %v703 = vpop.f32.mrf.mxu0
  %v704 = vadd.f32 %v560, %v703
  %v705 = vpop.f32.mrf.mxu0
  %706 = vmatprep.mubr.bf16.mxu0 0
  %707 = vmatmul.mubr.bf16.gmra.mxu0 %v534
  %v708 = vpop.f32.mrf.mxu0
  %v709 = vadd.f32 %v560, %v708
  %v710 = vpop.f32.mrf.mxu0
  %v711 = vpop.f32.mrf.mxu0
  %v712 = vadd.f32 %v560, %v711
  %v713 = vpop.f32.mrf.mxu0
  %714 = vmatprep.mubr.bf16.mxu0 0
  %715 = vmatmul.mubr.bf16.gmra.mxu0 %v535
  %v716 = vpop.f32.mrf.mxu0
  %v717 = vadd.f32 %v560, %v716
  %v718 = vpop.f32.mrf.mxu0
  %v719 = vpop.f32.mrf.mxu0
  %v720 = vadd.f32 %v560, %v719
  %v721 = vpop.f32.mrf.mxu0
  %722 = vmatprep.mubr.bf16.mxu0 0
  %723 = vmatmul.mubr.bf16.gmra.mxu0 %v536
  %v724 = vpop.f32.mrf.mxu0
  %v725 = vadd.f32 %v560, %v724
  %v726 = vpop.f32.mrf.mxu0
  %v727 = vpop.f32.mrf.mxu0
  %v728 = vadd.f32 %v560, %v727
  %v729 = vpop.f32.mrf.mxu0
  %730 = vmatprep.mubr.bf16.mxu0 0
  %731 = vmatmul.mubr.bf16.gmra.mxu0 %v537
  %v732 = vpop.f32.mrf.mxu0
  %v733 = vadd.f32 %v560, %v732
  %v734 = vpop.f32.mrf.mxu0
  %v735 = vpop.f32.mrf.mxu0
  %v736 = vadd.f32 %v560, %v735
  %v737 = vpop.f32.mrf.mxu0
  %738 = vmatprep.mubr.bf16.mxu0 0
  %739 = vmatmul.mubr.bf16.gmra.mxu0 %v538
  %v740 = vpop.f32.mrf.mxu0
  %v741 = vadd.f32 %v560, %v740
  %v742 = vpop.f32.mrf.mxu0
  %v743 = vpop.f32.mrf.mxu0
  %v744 = vpop.f32.mrf.mxu0
  %745 = vdwg.mxu0
  %746 = vst [vmem:[%s7] sm:$0xff] %v645
  %747 = vst [vmem:[%s7 + $0x8] sm:$0xff] %v648
  %748 = vst [vmem:[%s7 + $0x10] sm:$0xff] %v653
  %749 = vst [vmem:[%s7 + $0x18] sm:$0xff] %v656
  %750 = vst [vmem:[%s7 + $0x20] sm:$0xff] %v661
  %751 = vst [vmem:[%s7 + $0x28] sm:$0xff] %v664
  %752 = vst [vmem:[%s7 + $0x30] sm:$0xff] %v669
  %753 = vst [vmem:[%s7 + $0x38] sm:$0xff] %v672
  %754 = vst [vmem:[%s7 + $0x40] sm:$0xff] %v677
  %755 = vst [vmem:[%s7 + $0x48] sm:$0xff] %v680
  %756 = vst [vmem:[%s7 + $0x50] sm:$0xff] %v685
  %757 = vst [vmem:[%s7 + $0x58] sm:$0xff] %v688
  %758 = vst [vmem:[%s7 + $0x60] sm:$0xff] %v693
  %759 = vst [vmem:[%s7 + $0x68] sm:$0xff] %v696
  %760 = vst [vmem:[%s7 + $0x70] sm:$0xff] %v701
  %761 = vst [vmem:[%s7 + $0x78] sm:$0xff] %v704
  %762 = vst [vmem:[%s7 + $0x80] sm:$0xff] %v709
  %763 = vst [vmem:[%s7 + $0x88] sm:$0xff] %v712
  %764 = vst [vmem:[%s7 + $0x90] sm:$0xff] %v717
  %765 = vst [vmem:[%s7 + $0x98] sm:$0xff] %v720
  %766 = vst [vmem:[%s7 + $0xa0] sm:$0xff] %v725
  %767 = vst [vmem:[%s7 + $0xa8] sm:$0xff] %v728
  %768 = vst [vmem:[%s7 + $0xb0] sm:$0xff] %v733
  %769 = vst [vmem:[%s7 + $0xb8] sm:$0xff] %v736
  %770 = vst [vmem:[%s7 + $0xc0] sm:$0xff] %v741
  // Predicated region
  $region30: #{neural_net_forward.1} parent=0 // pred_check
    _
  $region31: #{neural_net_forward.1} parent=0 // pred_check_branch
    %772 = sbr.rel (0) target = $region33
  $region32: #{neural_net_forward.1} parent=0 // pred_region
    _
  $region33: #{neural_net_forward.1} parent=0 // pred_fallthru
    _
  // Predicated region
  $region34: #{neural_net_forward.1} parent=0 // pred_check
    _
  $region35: #{neural_net_forward.1} parent=0 // pred_check_branch
    %774 = sbr.rel (0) target = $region37
  $region36: #{neural_net_forward.1} parent=0 // pred_region
    _
  $region37: #{neural_net_forward.1} parent=0 // pred_fallthru
    _

</llo_original>
